<compile_context>
chip_gen: v7x
topology: tpu7x:2x2x1
jax: 0.10.0
libtpu: 0.0.40
codegen_flags: <defaults>
</compile_context>

<pallas_src>
import functools
import math

import jax
import jax.numpy as jnp
from jax import lax
from jax.experimental import pallas as pl
from jax.experimental.pallas import tpu as pltpu


# ----------------------------------------------------------------------------
# Pallas linear (matmul + bias) kernel, tiled over (M, N)
# ----------------------------------------------------------------------------
def _linear_kernel(x_ref, w_ref, b_ref, o_ref):
    acc = jnp.dot(x_ref[...], w_ref[...], preferred_element_type=jnp.float32)
    o_ref[...] = (acc + b_ref[...]).astype(o_ref.dtype)


def pallas_linear(x, w, b, *, out_dtype=jnp.float32, tm=512, tn=512):
    """y = x @ w + b.  x: (M, K), w: (K, N), b: (N,).  Tiled over M and N."""
    M, K = x.shape
    N = w.shape[1]
    TM = M if M <= tm else tm          # tm multiple of 8   -> legal block
    TN = N if N <= tn else tn          # tn multiple of 128 -> legal block
    grid = (pl.cdiv(M, TM), pl.cdiv(N, TN))
    return pl.pallas_call(
        _linear_kernel,
        out_shape=jax.ShapeDtypeStruct((M, N), out_dtype),
        grid=grid,
        in_specs=[
            pl.BlockSpec((TM, K), lambda i, j: (i, 0)),
            pl.BlockSpec((K, TN), lambda i, j: (0, j)),
            pl.BlockSpec((1, TN), lambda i, j: (0, j)),
        ],
        out_specs=pl.BlockSpec((TM, TN), lambda i, j: (i, j)),
        compiler_params=pltpu.CompilerParams(
            dimension_semantics=("parallel", "parallel")),
    )(x, w, b.reshape(1, N))


def _ref_linear(x, w, b, *, out_dtype=jnp.float32):
    return (x @ w + b).astype(out_dtype)


# ----------------------------------------------------------------------------
# Core multi-scale deformable attention kernel
#   one (batch, query-tile) per grid step; all heads handled inside the step
# ----------------------------------------------------------------------------
def _msda_kernel(px_ref, py_ref, attn_ref, value_ref, out_ref, *,
                 spatial_shapes, num_heads, num_points):
    nq = px_ref.shape[0]
    Dv = value_ref.shape[-1]
    hd = Dv // num_heads
    num_levels = len(spatial_shapes)
    LP = num_levels * num_points

    px = px_ref[...]            # (nq, H*L*P) pixel-x coords = locx*Wl - 0.5
    py = py_ref[...]            # (nq, H*L*P) pixel-y coords = locy*Hl - 0.5
    attn = attn_ref[...]        # (nq, H*L*P) softmaxed attention weights

    # Per-level pixel-coordinate rows, hoisted out of the head loop
    # (JAX does not CSE broadcasts -> build exactly once).
    lvl_kx, lvl_ky, lvl_start = [], [], []
    start = 0
    for (Hl, Wl) in spatial_shapes:
        HW = Hl * Wl
        kf = lax.broadcasted_iota(jnp.float32, (1, HW), 1)
        ky = jnp.floor(kf / float(Wl))           # exact for HW < 2**24
        kx = kf - ky * float(Wl)
        lvl_kx.append(kx)
        lvl_ky.append(ky)
        lvl_start.append(start)
        start += HW

    outs = []
    for h in range(num_heads):                   # head-outer: one live accumulator
        acc = jnp.zeros((nq, hd), jnp.float32)
        for lvl, (Hl, Wl) in enumerate(spatial_shapes):
            HW = Hl * Wl
            kx, ky = lvl_kx[lvl], lvl_ky[lvl]
            s0 = lvl_start[lvl]
            w_comb = jnp.zeros((nq, HW), jnp.float32)
            for p in range(num_points):
                c = h * LP + lvl * num_points + p
                ixc = px[:, c:c + 1]             # (nq, 1) precomputed pixel coords
                iyc = py[:, c:c + 1]
                ac = attn[:, c:c + 1]
                # Bilinear "tent": weight at in-bounds pixel (kx, ky) is
                #   relu(1-|kx-ix|) * relu(1-|ky-iy|) * attn
                # Out-of-bounds corners have no lane -> zeros padding for free.
                tx = jnp.maximum(1.0 - jnp.abs(kx - ixc), 0.0)         # (nq, HW)
                ty = jnp.maximum(ac - jnp.abs(ky - iyc) * ac, 0.0)     # = ac*relu(1-|dy|)
                w_comb = w_comb + tx * ty
            # w_comb stays f32 (MXU has slack); only the small value slice is upcast.
            v_l = value_ref[s0:s0 + HW, h * hd:(h + 1) * hd]           # (HW, hd)
            acc = acc + jnp.dot(w_comb, v_l.astype(jnp.float32),
                                preferred_element_type=jnp.float32)
        outs.append(acc)

    # single lane-dense store of all heads
    out_ref[...] = jnp.concatenate(outs, axis=-1).astype(out_ref.dtype)


def msda_core(px, py, attn, value, spatial_shapes, *, num_heads, num_points,
              q_tile=128, vmem_limit_bytes=None):
    """px/py/attn: (bs, nq, H*L*P); value: (bs, nv, H*hd) -> (bs, nq, H*hd).

    q_tile: 128 is a safe default (v7x 64 MiB VMEM); sweep 256-512 on v6e.
    """
    bs, nq, HLP = px.shape
    nv, Dv = value.shape[1], value.shape[2]
    num_levels = len(spatial_shapes)
    assert HLP == num_heads * num_levels * num_points

    qt = nq if nq < q_tile else q_tile           # fixed tile; Pallas pads remainder
    grid = (bs, pl.cdiv(nq, qt))

    kernel = functools.partial(
        _msda_kernel,
        spatial_shapes=tuple((int(h), int(w)) for h, w in spatial_shapes),
        num_heads=num_heads, num_points=num_points)

    cp = dict(dimension_semantics=("parallel", "parallel"))
    if vmem_limit_bytes is not None:
        cp["vmem_limit_bytes"] = int(vmem_limit_bytes)

    return pl.pallas_call(
        kernel,
        out_shape=jax.ShapeDtypeStruct((bs, nq, Dv), jnp.float32),
        grid=grid,
        in_specs=[
            pl.BlockSpec((None, qt, HLP), lambda b, q: (b, q, 0)),
            pl.BlockSpec((None, qt, HLP), lambda b, q: (b, q, 0)),
            pl.BlockSpec((None, qt, HLP), lambda b, q: (b, q, 0)),
            # value block index constant along the inner q axis -> stays resident
            # TODO(synk): v7x/production — single-buffer (pl.Buffered(1)), chunk HW,
            # or switch the large encoder levels to a DMA-gather path.
            pl.BlockSpec((None, nv, Dv), lambda b, q: (b, 0, 0)),
        ],
        out_specs=pl.BlockSpec((None, qt, Dv), lambda b, q: (b, q, 0)),
        compiler_params=pltpu.CompilerParams(**cp),
    )(px, py, attn, value)


# ----------------------------------------------------------------------------
# Pure-JAX reference core (gather-based bilinear, all f32)
# ----------------------------------------------------------------------------
def _ref_core(value_bh, px, py, attn, spatial_shapes, num_points):
    """value_bh: (BH, nv, D); px/py/attn: (BH, nq, L*P) with pixel coords."""
    BH, _, D = value_bh.shape
    nq = px.shape[1]
    out = jnp.zeros((BH, nq, D), jnp.float32)
    start = 0
    for lvl, (Hl, Wl) in enumerate(spatial_shapes):
        HW = Hl * Wl
        vl = value_bh[:, start:start + HW]                             # (BH, HW, D)
        for p in range(num_points):
            col = lvl * num_points + p
            ix, iy, a = px[:, :, col], py[:, :, col], attn[:, :, col]
            x0 = jnp.floor(ix)
            y0 = jnp.floor(iy)
            x1, y1 = x0 + 1.0, y0 + 1.0
            wx1 = ix - x0
            wx0 = 1.0 - wx1
            wy1 = iy - y0
            wy0 = 1.0 - wy1
            sample = jnp.zeros((BH, nq, D), jnp.float32)
            for xc, yc, wx, wy in ((x0, y0, wx0, wy0), (x1, y0, wx1, wy0),
                                   (x0, y1, wx0, wy1), (x1, y1, wx1, wy1)):
                valid = ((xc >= 0.0) & (xc <= Wl - 1.0)
                         & (yc >= 0.0) & (yc <= Hl - 1.0))
                xi = jnp.clip(xc, 0.0, Wl - 1.0).astype(jnp.int32)
                yi = jnp.clip(yc, 0.0, Hl - 1.0).astype(jnp.int32)
                idx = yi * Wl + xi                                     # (BH, nq)
                g = jnp.take_along_axis(vl, idx[..., None], axis=1)    # (BH, nq, D)
                w = jnp.where(valid, wx * wy, 0.0)
                sample = sample + w[..., None] * g
            out = out + a[..., None] * sample
        start += HW
    return out


# ----------------------------------------------------------------------------
# Full forward (glue in plain JAX, compute in Pallas)
# ----------------------------------------------------------------------------
def multi_scale_deformable_attention(query, value, reference_points,
                                     spatial_shapes, params, *,
                                     num_heads, num_levels, num_points,
                                     query_pos=None, identity=None,
                                     key_padding_mask=None,
                                     batch_first=False, use_pallas=True,
                                     compute_dtype=jnp.bfloat16,
                                     q_tile=128, vmem_limit_bytes=None):
    linear = pallas_linear if use_pallas else _ref_linear

    if value is None:
        value = query
    if identity is None:
        identity = query
    if query_pos is not None:
        query = query + query_pos                                      # pos_add
    if not batch_first:
        query = jnp.transpose(query, (1, 0, 2))
        value = jnp.transpose(value, (1, 0, 2))
    bs, nq, E = query.shape
    _, nv, _ = value.shape
    assert sum(h * w for h, w in spatial_shapes) == nv

    # value projection, emitted directly in the kernel compute dtype
    vp_dtype = compute_dtype if use_pallas else jnp.float32
    v = linear(value.reshape(bs * nv, E), params["w_value"], params["b_value"],
               out_dtype=vp_dtype)
    Dv = v.shape[-1]
    v = v.reshape(bs, nv, Dv)
    if key_padding_mask is not None:
        v = v * (1.0 - key_padding_mask[..., None].astype(v.dtype))    # mask_mul
    head_dim = Dv // num_heads

    # fused sampling-offsets + attention-logits projection (single matmul)
    q_flat = query.reshape(bs * nq, E)
    w_oa = jnp.concatenate([params["w_off"], params["w_attn"]], axis=1)
    b_oa = jnp.concatenate([params["b_off"], params["b_attn"]], axis=0)
    oa = linear(q_flat, w_oa, b_oa, out_dtype=jnp.float32)
    n_off = num_heads * num_levels * num_points * 2
    offs = oa[:, :n_off].reshape(bs, nq, num_heads, num_levels, num_points, 2)
    logits = oa[:, n_off:].reshape(bs, nq, num_heads, num_levels * num_points)

    # SegmentLUTSoftmax(dim=-1, min_sub_out=-12): lane-dense per-head softmax
    m = jnp.max(logits, axis=-1, keepdims=True)
    e = jnp.exp(jnp.maximum(logits - m, -12.0))
    attn = e / jnp.sum(e, axis=-1, keepdims=True)                      # (bs,nq,H,LP)

    size_wh = jnp.asarray([[w, h] for h, w in spatial_shapes], jnp.float32)  # (L,2)
    if reference_points.shape[-1] == 2:
        offs = offs / size_wh[None, None, None, :, None, :]
        loc = reference_points[:, :, None, :, None, :] + offs          # (bs,nq,H,L,P,2)
    elif reference_points.shape[-1] == 4:
        loc = (reference_points[:, :, None, :, None, :2]
               + offs * (0.5 / num_points)
               * reference_points[:, :, None, :, None, 2:])
    else:
        raise ValueError("reference_points last dim must be 2 or 4")

    # Lane-dense pixel coords: grid = 2*loc - 1; grid_sample(align_corners=False)
    #   pixel = ((grid + 1) * size - 1) / 2 = loc * size - 0.5
    HLP = num_heads * num_levels * num_points
    pix = loc * size_wh[None, None, None, :, None, :] - 0.5
    px = pix[..., 0].reshape(bs, nq, HLP)                              # head-major
    py = pix[..., 1].reshape(bs, nq, HLP)
    attn_flat = attn.reshape(bs, nq, HLP)

    if use_pallas:
        core = msda_core(px, py, attn_flat, v, spatial_shapes,
                         num_heads=num_heads, num_points=num_points,
                         q_tile=q_tile, vmem_limit_bytes=vmem_limit_bytes)
    else:
        LP = num_levels * num_points

        def _to_bh(x):
            return jnp.transpose(x.reshape(bs, nq, num_heads, LP),
                                 (0, 2, 1, 3)).reshape(bs * num_heads, nq, LP)

        v_bh = jnp.transpose(v.reshape(bs, nv, num_heads, head_dim),
                             (0, 2, 1, 3)).reshape(bs * num_heads, nv, head_dim)
        core_bh = _ref_core(v_bh, _to_bh(px), _to_bh(py), _to_bh(attn_flat),
                            spatial_shapes, num_points)
        core = jnp.transpose(core_bh.reshape(bs, num_heads, nq, head_dim),
                             (0, 2, 1, 3)).reshape(bs, nq, Dv)

    out = linear(core.reshape(bs * nq, Dv), params["w_out"], params["b_out"],
                 out_dtype=jnp.float32)
    out = out.reshape(bs, nq, E)
    if not batch_first:
        out = jnp.transpose(out, (1, 0, 2))
    # dropout is identity at inference; residual_add
    return out + identity


# ----------------------------------------------------------------------------
# Deterministic parameter init (shapes per the module's __init__/_reset_parameters)
# ----------------------------------------------------------------------------
def _grid_init_bias(num_heads, num_levels, num_points):
    thetas = jnp.arange(num_heads, dtype=jnp.float32) * (2.0 * math.pi / num_heads)
    grid = jnp.stack([jnp.cos(thetas), jnp.sin(thetas)], axis=-1)      # (H, 2)
    grid = grid / jnp.max(jnp.abs(grid), axis=-1, keepdims=True)
    grid = jnp.tile(grid.reshape(num_heads, 1, 1, 2), (1, num_levels, num_points, 1))
    scale = jnp.arange(1, num_points + 1, dtype=jnp.float32).reshape(1, 1, num_points, 1)
    return (grid * scale).reshape(-1)


def _xavier_uniform(key, fan_in, fan_out):
    bound = math.sqrt(6.0 / (fan_in + fan_out))
    return jax.random.uniform(key, (fan_in, fan_out), jnp.float32, -bound, bound)


if __name__ == "__main__":
    embed_dims, num_heads, num_levels, num_points = 32, 4, 2, 2
    bs, nq = 2, 8
    spatial_shapes = [(8, 8), (4, 4)]                                  # (h, w) per level
    nv = sum(h * w for h, w in spatial_shapes)                         # 80
    value_proj_size = embed_dims                                       # value_proj_ratio = 1.0

    key = jax.random.PRNGKey(0)
    ks = jax.random.split(key, 10)

    params = {
        "w_value": _xavier_uniform(ks[0], embed_dims, value_proj_size),
        "b_value": jnp.zeros((value_proj_size,), jnp.float32),
        # Module zero-inits these weights; small random weights are used so the
        # sampling / attention paths are exercised non-trivially (deterministic).
        "w_off": 0.02 * jax.random.normal(
            ks[1], (embed_dims, num_heads * num_levels * num_points * 2), jnp.float32),
        "b_off": _grid_init_bias(num_heads, num_levels, num_points),
        "w_attn": 0.02 * jax.random.normal(
            ks[2], (embed_dims, num_heads * num_levels * num_points), jnp.float32),
        "b_attn": jnp.zeros((num_heads * num_levels * num_points,), jnp.float32),
        "w_out": _xavier_uniform(ks[3], value_proj_size, embed_dims),
        "b_out": jnp.zeros((embed_dims,), jnp.float32),
    }

    query = jax.random.normal(ks[4], (nq, bs, embed_dims), jnp.float32)
    value = jax.random.normal(ks[5], (nv, bs, embed_dims), jnp.float32)
    query_pos = 0.1 * jax.random.normal(ks[6], (nq, bs, embed_dims), jnp.float32)
    reference_points = jax.random.uniform(
        ks[7], (bs, nq, num_levels, 2), jnp.float32, 0.05, 0.95)

    common = dict(num_heads=num_heads, num_levels=num_levels, num_points=num_points,
                  query_pos=query_pos, batch_first=False)

    # Pure-JAX reference (f32 gather-based bilinear)
    ref = multi_scale_deformable_attention(
        query, value, reference_points, spatial_shapes, params,
        use_pallas=False, **common)
    ref = jax.block_until_ready(ref)

    # Strict correctness check: Pallas with f32 value path
    out_f32 = multi_scale_deformable_attention(
        query, value, reference_points, spatial_shapes, params,
        use_pallas=True, compute_dtype=jnp.float32, **common)
    out_f32 = jax.block_until_ready(out_f32)
    assert out_f32.shape == (nq, bs, embed_dims)
    assert bool(jnp.all(jnp.isfinite(out_f32)))
    assert bool(jnp.allclose(out_f32, ref, rtol=1e-4, atol=1e-4)), (
        f"f32 path max abs err {float(jnp.max(jnp.abs(out_f32 - ref)))}")

    # Performance default: bf16 value tile (f32 combining weights + f32 accumulation)
    out_bf16 = multi_scale_deformable_attention(
        query, value, reference_points, spatial_shapes, params,
        use_pallas=True, compute_dtype=jnp.bfloat16, **common)
    out_bf16 = jax.block_until_ready(out_bf16)
    assert out_bf16.shape == (nq, bs, embed_dims)
    assert bool(jnp.all(jnp.isfinite(out_bf16)))
    assert bool(jnp.allclose(out_bf16, ref, rtol=5e-2, atol=5e-2)), (
        f"bf16 path max abs err {float(jnp.max(jnp.abs(out_bf16 - ref)))}")

    print("KERNEL_OK")
</pallas_src>

<mosaic_0001>
module attributes {stable_mosaic.version = 11 : i64} {
  func.func @_linear_kernel(%arg0: i32, %arg1: i32, %arg2: memref<160x32xf32, #tpu.memory_space<vmem>>, %arg3: memref<32x32xf32, #tpu.memory_space<vmem>>, %arg4: memref<1x32xf32, #tpu.memory_space<vmem>>, %arg5: memref<160x32xf32, #tpu.memory_space<vmem>>) attributes {dimension_semantics = [#tpu.dimension_semantics<parallel>, #tpu.dimension_semantics<parallel>], iteration_bounds = array<i64: 1, 1>, scalar_prefetch = 0 : i64, scratch_operands = 0 : i64, tpu.core_type = #tpu.core_type<tc>, window_params = [{transform_indices = @transform_0, window_bounds = array<i64: 160, 32>}, {transform_indices = @transform_1, window_bounds = array<i64: 32, 32>}, {transform_indices = @transform_2, window_bounds = array<i64: 1, 32>}, {transform_indices = @transform_3, window_bounds = array<i64: 160, 32>}]} {
    %c0 = arith.constant 0 : index
    %c0_0 = arith.constant 0 : index
    %0 = vector.load %arg2[%c0, %c0_0] : memref<160x32xf32, #tpu.memory_space<vmem>>, vector<160x32xf32>
    %c0_1 = arith.constant 0 : index
    %c0_2 = arith.constant 0 : index
    %1 = vector.load %arg3[%c0_1, %c0_2] : memref<32x32xf32, #tpu.memory_space<vmem>>, vector<32x32xf32>
    %cst = arith.constant dense<0.000000e+00> : vector<160x32xf32>
    %2 = tpu.matmul %0, %1, %cst {dimension_numbers = #tpu.dot_dimension_numbers<[1], [0], [0], [1], [0, 0, 1, 1], [], []>} : vector<160x32xf32>, vector<32x32xf32>, vector<160x32xf32> -> vector<160x32xf32>
    %c0_3 = arith.constant 0 : index
    %c0_4 = arith.constant 0 : index
    %3 = vector.load %arg4[%c0_3, %c0_4] : memref<1x32xf32, #tpu.memory_space<vmem>>, vector<1x32xf32>
    %4 = vector.broadcast %3 : vector<1x32xf32> to vector<160x32xf32>
    %5 = arith.addf %2, %4 : vector<160x32xf32>
    %c0_5 = arith.constant 0 : index
    %c0_6 = arith.constant 0 : index
    %6 = vector.load %arg5[%c0_5, %c0_6] : memref<160x32xf32, #tpu.memory_space<vmem>>, vector<160x32xf32>
    tpu.vector_store %arg5[%c0_5, %c0_6], %5 {strides = array<i32>} : memref<160x32xf32, #tpu.memory_space<vmem>>, vector<160x32xf32>,
    return
  }
  func.func @transform_0(%arg0: i32, %arg1: i32) -> (i32, i32) {
    %c0_i32 = arith.constant 0 : i32
    %c0_i32_0 = arith.constant 0 : i32
    return %arg0, %c0_i32 : i32, i32
  }
  func.func @transform_1(%arg0: i32, %arg1: i32) -> (i32, i32) {
    %c0_i32 = arith.constant 0 : i32
    %c0_i32_0 = arith.constant 0 : i32
    return %c0_i32, %arg1 : i32, i32
  }
  func.func @transform_2(%arg0: i32, %arg1: i32) -> (i32, i32) {
    %c0_i32 = arith.constant 0 : i32
    %c0_i32_0 = arith.constant 0 : i32
    return %c0_i32, %arg1 : i32, i32
  }
  func.func @transform_3(%arg0: i32, %arg1: i32) -> (i32, i32) {
    %c0_i32 = arith.constant 0 : i32
    return %arg0, %arg1 : i32, i32
  }
}

</mosaic_0001>

<llo_original>
// kernel: tpu_custom_call.1
$region0: #{tpu_custom_call.1}
  #allocation0 [shape = 'u32[]', space=smem, size = 0x4, offset = 0x4, fixed_abs, tag = 'smem constant byte address 0x4 - core index']
  #allocation1 [shape = 'u32[144,128]{1,0:T(1,128)}', space=vmem, size = 0x12000, scoped, tag = 'internal scratch']
  %s0 = inlined_call_operand.vmem [shape: f32[160,32], index: 0, kind: input, shape index: {}]
  %s1 = inlined_call_operand.vmem [shape: f32[32,32], index: 1, kind: input, shape index: {}]
  %s2 = inlined_call_operand.vmem [shape: f32[1,32], index: 2, kind: input, shape index: {}]
  %s3 = inlined_call_operand.vmem [shape: f32[160,32], index: 3, kind: output, shape index: {}]
  %s4 = sld [smem:[#allocation0]]
  $region22: #{tpu_custom_call.1} parent=0
    _
  %s6 = ssub.s32 1, %s4
  %s7 = scalar_select 0, %s6, %s4
  // Predicated region
  $region2: #{tpu_custom_call.1} parent=0 // pred_check
    _
  $region3: #{tpu_custom_call.1} parent=0 // pred_check_branch
    %9 = sbr.rel (0) target = $region5
  $region4: #{tpu_custom_call.1} parent=0 // pred_region
    _
  $region5: #{tpu_custom_call.1} parent=0 // pred_fallthru
    _
  // Predicated region
  $region6: #{tpu_custom_call.1} parent=0 // pred_check
    _
  $region7: #{tpu_custom_call.1} parent=0 // pred_check_branch
    %11 = sbr.rel (0) target = $region9
  $region8: #{tpu_custom_call.1} parent=0 // pred_region
    _
  $region9: #{tpu_custom_call.1} parent=0 // pred_fallthru
    _
  // Predicated region
  $region10: #{tpu_custom_call.1} parent=0 // pred_check
    _
  $region11: #{tpu_custom_call.1} parent=0 // pred_check_branch
    %13 = sbr.rel (0) target = $region13
  $region12: #{tpu_custom_call.1} parent=0 // pred_region
    _
  $region13: #{tpu_custom_call.1} parent=0 // pred_fallthru
    _
  %v14 = vld [vmem:[%s0] sm:$0xff]
  %v15 = vld [vmem:[%s0 + $0x8] sm:$0xff]
  %v16 = vld [vmem:[%s0 + $0x10] sm:$0xff]
  %v17 = vld [vmem:[%s0 + $0x18] sm:$0xff]
  %v18 = vld [vmem:[%s0 + $0x20] sm:$0xff]
  %v19 = vld [vmem:[%s0 + $0x28] sm:$0xff]
  %v20 = vld [vmem:[%s0 + $0x30] sm:$0xff]
  %v21 = vld [vmem:[%s0 + $0x38] sm:$0xff]
  %v22 = vld [vmem:[%s0 + $0x40] sm:$0xff]
  %v23 = vld [vmem:[%s0 + $0x48] sm:$0xff]
  %v24 = vld [vmem:[%s0 + $0x50] sm:$0xff]
  %v25 = vld [vmem:[%s0 + $0x58] sm:$0xff]
  %v26 = vld [vmem:[%s0 + $0x60] sm:$0xff]
  %v27 = vld [vmem:[%s0 + $0x68] sm:$0xff]
  %v28 = vld [vmem:[%s0 + $0x70] sm:$0xff]
  %v29 = vld [vmem:[%s0 + $0x78] sm:$0xff]
  %v30 = vld [vmem:[%s0 + $0x80] sm:$0xff]
  %v31 = vld [vmem:[%s0 + $0x88] sm:$0xff]
  %v32 = vld [vmem:[%s0 + $0x90] sm:$0xff]
  %v33 = vld [vmem:[%s0 + $0x98] sm:$0xff]
  %v34 = vld [vmem:[%s1] sm:$0xff]
  %v35 = vld [vmem:[%s1 + $0x8] sm:$0xff]
  %v36 = vld [vmem:[%s1 + $0x10] sm:$0xff]
  %v37 = vld [vmem:[%s1 + $0x18] sm:$0xff]
  %v38 = vld [vmem:[%s2] sm:$0x1]
  %v40 = vlaneseq
  %v41 = vshrl.u32 %v40, 7
  %v42 = vsub.s32 0, %v41
  %v43 = vrot.slane %v38, %v42
  %vm45 = vcmask 261120
  %v47 = vsel %vm45, %v14, 0
  %v50 = vsel %vm45, %v15, 0
  %v53 = vsel %vm45, %v16, 0
  %v56 = vsel %vm45, %v17, 0
  %v59 = vsel %vm45, %v18, 0
  %v62 = vsel %vm45, %v19, 0
  %v65 = vsel %vm45, %v20, 0
  %v68 = vsel %vm45, %v21, 0
  %v71 = vsel %vm45, %v22, 0
  %v74 = vsel %vm45, %v23, 0
  %v77 = vsel %vm45, %v24, 0
  %v80 = vsel %vm45, %v25, 0
  %v83 = vsel %vm45, %v26, 0
  %v86 = vsel %vm45, %v27, 0
  %v89 = vsel %vm45, %v28, 0
  %v92 = vsel %vm45, %v29, 0
  %v95 = vsel %vm45, %v30, 0
  %v98 = vsel %vm45, %v31, 0
  %v101 = vsel %vm45, %v32, 0
  %v104 = vsel %vm45, %v33, 0
  %106 = vmatprep.subr.mxu0 0.0
  %107 = vmatpush1.msra.mxu0 %v34
  %108 = vmatprep.subr.mxu0 0.0
  %109 = vmatpush1.msra.mxu0 %v35
  %110 = vmatprep.subr.mxu0 0.0
  %111 = vmatpush1.msra.mxu0 %v36
  %112 = vmatprep.subr.mxu0 0.0
  %113 = vmatpush1.msra.mxu0 %v37
  %114 = vmatprep.subr.mxu0 0.0
  %115 = vmatpush1.msra.mxu0 0.0
  %116 = vmatprep.subr.mxu0 0.0
  %117 = vmatpush1.msra.mxu0 0.0
  %118 = vmatprep.subr.mxu0 0.0
  %119 = vmatpush1.msra.mxu0 0.0
  %120 = vmatprep.subr.mxu0 0.0
  %121 = vmatpush1.msra.mxu0 0.0
  %122 = vmatprep.subr.mxu0 0.0
  %123 = vmatpush1.msra.mxu0 0.0
  %124 = vmatprep.subr.mxu0 0.0
  %125 = vmatpush1.msra.mxu0 0.0
  %126 = vmatprep.subr.mxu0 0.0
  %127 = vmatpush1.msra.mxu0 0.0
  %128 = vmatprep.subr.mxu0 0.0
  %129 = vmatpush1.msra.mxu0 0.0
  %130 = vmatprep.subr.mxu0 0.0
  %131 = vmatpush1.msra.mxu0 0.0
  %132 = vmatprep.subr.mxu0 0.0
  %133 = vmatpush1.msra.mxu0 0.0
  %134 = vmatprep.subr.mxu0 0.0
  %135 = vmatpush1.msra.mxu0 0.0
  %136 = vmatprep.subr.mxu0 0.0
  %137 = vmatpush1.msra.mxu0 0.0
  %138 = vmatprep.subr.mxu0 0.0
  %139 = vmatpush1.msra.mxu0 0.0
  %140 = vmatprep.subr.mxu0 0.0
  %141 = vmatpush1.msra.mxu0 0.0
  %142 = vmatprep.subr.mxu0 0.0
  %143 = vmatpush1.msra.mxu0 0.0
  %144 = vmatprep.subr.mxu0 0.0
  %145 = vmatpush1.msra.mxu0 0.0
  %146 = vmatprep.subr.mxu0 0.0
  %147 = vmatpush1.msra.mxu0 0.0
  %148 = vmatprep.subr.mxu0 0.0
  %149 = vmatpush1.msra.mxu0 0.0
  %150 = vmatprep.subr.mxu0 0.0
  %151 = vmatpush1.msra.mxu0 0.0
  %152 = vmatprep.subr.mxu0 0.0
  %153 = vmatpush1.msra.mxu0 0.0
  %154 = vmatprep.subr.mxu0 0.0
  %155 = vmatpush1.msra.mxu0 0.0
  %156 = vmatprep.subr.mxu0 0.0
  %157 = vmatpush1.msra.mxu0 0.0
  %158 = vmatprep.subr.mxu0 0.0
  %159 = vmatpush1.msra.mxu0 0.0
  %160 = vmatprep.subr.mxu0 0.0
  %161 = vmatpush1.msra.mxu0 0.0
  %162 = vmatprep.subr.mxu0 0.0
  %163 = vmatpush1.msra.mxu0 0.0
  %164 = vmatprep.subr.mxu0 0.0
  %165 = vmatpush1.msra.mxu0 0.0
  %166 = vmatprep.subr.mxu0 0.0
  %167 = vmatpush1.msra.mxu0 0.0
  %168 = vmatprep.subr.mxu0 0.0
  %169 = vmatpush1.msra.mxu0 0.0
  %170 = vmatprep.mubr.f32.mxu0 0.0
  %171 = vmatmul.mubr.f32.gmra.mrb[0].mxu0 %v47
  %v172 = vpop.f32.mrb[0].mxu0
  %v173 = vadd.f32 %v43, %v172
  %v174 = vpop.f32.mrb[0].mxu0
  %175 = vmatprep.mubr.f32.mxu0 0.0
  %176 = vmatmul.mubr.f32.gmra.mrb[0].mxu0 %v50
  %v177 = vpop.f32.mrb[0].mxu0
  %v178 = vadd.f32 %v43, %v177
  %v179 = vpop.f32.mrb[0].mxu0
  %180 = vmatprep.mubr.f32.mxu0 0.0
  %181 = vmatmul.mubr.f32.gmra.mrb[0].mxu0 %v53
  %v182 = vpop.f32.mrb[0].mxu0
  %v183 = vadd.f32 %v43, %v182
  %v184 = vpop.f32.mrb[0].mxu0
  %185 = vmatprep.mubr.f32.mxu0 0.0
  %186 = vmatmul.mubr.f32.gmra.mrb[0].mxu0 %v56
  %v187 = vpop.f32.mrb[0].mxu0
  %v188 = vadd.f32 %v43, %v187
  %v189 = vpop.f32.mrb[0].mxu0
  %190 = vmatprep.mubr.f32.mxu0 0.0
  %191 = vmatmul.mubr.f32.gmra.mrb[0].mxu0 %v59
  %v192 = vpop.f32.mrb[0].mxu0
  %v193 = vadd.f32 %v43, %v192
  %v194 = vpop.f32.mrb[0].mxu0
  %195 = vmatprep.mubr.f32.mxu0 0.0
  %196 = vmatmul.mubr.f32.gmra.mrb[0].mxu0 %v62
  %v197 = vpop.f32.mrb[0].mxu0
  %v198 = vadd.f32 %v43, %v197
  %v199 = vpop.f32.mrb[0].mxu0
  %200 = vmatprep.mubr.f32.mxu0 0.0
  %201 = vmatmul.mubr.f32.gmra.mrb[0].mxu0 %v65
  %v202 = vpop.f32.mrb[0].mxu0
  %v203 = vadd.f32 %v43, %v202
  %v204 = vpop.f32.mrb[0].mxu0
  %205 = vmatprep.mubr.f32.mxu0 0.0
  %206 = vmatmul.mubr.f32.gmra.mrb[0].mxu0 %v68
  %v207 = vpop.f32.mrb[0].mxu0
  %v208 = vadd.f32 %v43, %v207
  %v209 = vpop.f32.mrb[0].mxu0
  %210 = vmatprep.mubr.f32.mxu0 0.0
  %211 = vmatmul.mubr.f32.gmra.mrb[0].mxu0 %v71
  %v212 = vpop.f32.mrb[0].mxu0
  %v213 = vadd.f32 %v43, %v212
  %v214 = vpop.f32.mrb[0].mxu0
  %215 = vmatprep.mubr.f32.mxu0 0.0
  %216 = vmatmul.mubr.f32.gmra.mrb[0].mxu0 %v74
  %v217 = vpop.f32.mrb[0].mxu0
  %v218 = vadd.f32 %v43, %v217
  %v219 = vpop.f32.mrb[0].mxu0
  %220 = vmatprep.mubr.f32.mxu0 0.0
  %221 = vmatmul.mubr.f32.gmra.mrb[0].mxu0 %v77
  %v222 = vpop.f32.mrb[0].mxu0
  %v223 = vadd.f32 %v43, %v222
  %v224 = vpop.f32.mrb[0].mxu0
  %225 = vmatprep.mubr.f32.mxu0 0.0
  %226 = vmatmul.mubr.f32.gmra.mrb[0].mxu0 %v80
  %v227 = vpop.f32.mrb[0].mxu0
  %v228 = vadd.f32 %v43, %v227
  %v229 = vpop.f32.mrb[0].mxu0
  %230 = vmatprep.mubr.f32.mxu0 0.0
  %231 = vmatmul.mubr.f32.gmra.mrb[0].mxu0 %v83
  %v232 = vpop.f32.mrb[0].mxu0
  %v233 = vadd.f32 %v43, %v232
  %v234 = vpop.f32.mrb[0].mxu0
  %235 = vmatprep.mubr.f32.mxu0 0.0
  %236 = vmatmul.mubr.f32.gmra.mrb[0].mxu0 %v86
  %v237 = vpop.f32.mrb[0].mxu0
  %v238 = vadd.f32 %v43, %v237
  %v239 = vpop.f32.mrb[0].mxu0
  %240 = vmatprep.mubr.f32.mxu0 0.0
  %241 = vmatmul.mubr.f32.gmra.mrb[0].mxu0 %v89
  %v242 = vpop.f32.mrb[0].mxu0
  %v243 = vadd.f32 %v43, %v242
  %v244 = vpop.f32.mrb[0].mxu0
  %245 = vmatprep.mubr.f32.mxu0 0.0
  %246 = vmatmul.mubr.f32.gmra.mrb[0].mxu0 %v92
  %v247 = vpop.f32.mrb[0].mxu0
  %v248 = vadd.f32 %v43, %v247
  %v249 = vpop.f32.mrb[0].mxu0
  %250 = vmatprep.mubr.f32.mxu0 0.0
  %251 = vmatmul.mubr.f32.gmra.mrb[0].mxu0 %v95
  %v252 = vpop.f32.mrb[0].mxu0
  %v253 = vadd.f32 %v43, %v252
  %v254 = vpop.f32.mrb[0].mxu0
  %255 = vmatprep.mubr.f32.mxu0 0.0
  %256 = vmatmul.mubr.f32.gmra.mrb[0].mxu0 %v98
  %v257 = vpop.f32.mrb[0].mxu0
  %v258 = vadd.f32 %v43, %v257
  %v259 = vpop.f32.mrb[0].mxu0
  %260 = vmatprep.mubr.f32.mxu0 0.0
  %261 = vmatmul.mubr.f32.gmra.mrb[0].mxu0 %v101
  %v262 = vpop.f32.mrb[0].mxu0
  %v263 = vadd.f32 %v43, %v262
  %v264 = vpop.f32.mrb[0].mxu0
  %265 = vmatprep.mubr.f32.mxu0 0.0
  %266 = vmatmul.mubr.f32.gmra.mrb[0].mxu0 %v104
  %v267 = vpop.f32.mrb[0].mxu0
  %v268 = vadd.f32 %v43, %v267
  %v269 = vpop.f32.mrb[0].mxu0
  %270 = vdwg.mxu0
  %271 = vst.msk [vmem:[%s3] sm:$0xff] %vm45, %v173
  %272 = vst.msk [vmem:[%s3 + $0x8] sm:$0xff] %vm45, %v178
  %273 = vst.msk [vmem:[%s3 + $0x10] sm:$0xff] %vm45, %v183
  %274 = vst.msk [vmem:[%s3 + $0x18] sm:$0xff] %vm45, %v188
  %275 = vst.msk [vmem:[%s3 + $0x20] sm:$0xff] %vm45, %v193
  %276 = vst.msk [vmem:[%s3 + $0x28] sm:$0xff] %vm45, %v198
  %277 = vst.msk [vmem:[%s3 + $0x30] sm:$0xff] %vm45, %v203
  %278 = vst.msk [vmem:[%s3 + $0x38] sm:$0xff] %vm45, %v208
  %279 = vst.msk [vmem:[%s3 + $0x40] sm:$0xff] %vm45, %v213
  %280 = vst.msk [vmem:[%s3 + $0x48] sm:$0xff] %vm45, %v218
  %281 = vst.msk [vmem:[%s3 + $0x50] sm:$0xff] %vm45, %v223
  %282 = vst.msk [vmem:[%s3 + $0x58] sm:$0xff] %vm45, %v228
  %283 = vst.msk [vmem:[%s3 + $0x60] sm:$0xff] %vm45, %v233
  %284 = vst.msk [vmem:[%s3 + $0x68] sm:$0xff] %vm45, %v238
  %285 = vst.msk [vmem:[%s3 + $0x70] sm:$0xff] %vm45, %v243
  %286 = vst.msk [vmem:[%s3 + $0x78] sm:$0xff] %vm45, %v248
  %287 = vst.msk [vmem:[%s3 + $0x80] sm:$0xff] %vm45, %v253
  %288 = vst.msk [vmem:[%s3 + $0x88] sm:$0xff] %vm45, %v258
  %289 = vst.msk [vmem:[%s3 + $0x90] sm:$0xff] %vm45, %v263
  %290 = vst.msk [vmem:[%s3 + $0x98] sm:$0xff] %vm45, %v268
  // Predicated region
  $region14: #{tpu_custom_call.1} parent=0 // pred_check
    _
  $region15: #{tpu_custom_call.1} parent=0 // pred_check_branch
    %292 = sbr.rel (0) target = $region17
  $region16: #{tpu_custom_call.1} parent=0 // pred_region
    _
  $region17: #{tpu_custom_call.1} parent=0 // pred_fallthru
    _
  // Predicated region
  $region18: #{tpu_custom_call.1} parent=0 // pred_check
    _
  $region19: #{tpu_custom_call.1} parent=0 // pred_check_branch
    %294 = sbr.rel (0) target = $region21
  $region20: #{tpu_custom_call.1} parent=0 // pred_region
    _
  $region21: #{tpu_custom_call.1} parent=0 // pred_fallthru
    _

</llo_original>
